<compile_context>
chip_gen: v6e
topology: v6e:2x2x1
jax: 0.10.0
libtpu: 0.0.40
codegen_flags: <defaults>
</compile_context>

<pallas_src>
import functools
import math

import jax
import jax.numpy as jnp
from jax.experimental import pallas as pl
from jax.experimental.pallas import tpu as pltpu

EPS = 1e-5  # nn.LayerNorm default eps


# ---------------------------------------------------------------------------
# helpers
# ---------------------------------------------------------------------------
def _layernorm(x, gamma, beta):
    mean = jnp.mean(x, axis=-1, keepdims=True)
    var = jnp.mean((x - mean) ** 2, axis=-1, keepdims=True)
    return (x - mean) * jax.lax.rsqrt(var + EPS) * gamma + beta


def _gelu_exact(x):
    # nn.GELU() default = exact (erf-based) GELU, computed in f32.
    return 0.5 * x * (1.0 + jax.lax.erf(x * (1.0 / math.sqrt(2.0))))


def _split_heads(x_bf16, num_heads, head_dim):
    """bf16 (rows, C) -> bf16 (num_heads, rows, head_dim).

    The relayout (reshape + 3D transpose) is done in f32 — the packed-bf16
    transpose path is deliberately avoided for Mosaic-lowering safety — and
    the result is re-cast to bf16 for the MXU.
    # TODO(synk): when head_dim < 128 the per-head matmuls underfill MXU lanes;
    # packing 2-4 heads along the lane axis would restore full-width pushes.
    """
    rows = x_bf16.shape[0]
    x = x_bf16.astype(jnp.float32).reshape(rows, num_heads, head_dim)
    return x.transpose(1, 0, 2).astype(jnp.bfloat16)


def _const_spec(shape):
    """BlockSpec for a grid-invariant operand (same block every grid step).

    # TODO(synk): single-buffer these via BlockSpec(pipeline_mode=pl.Buffered(1))
    # once that path is stable in this jax version; Pallas double-buffers
    # invariant inputs by default, doubling their VMEM footprint.
    """
    n = len(shape)
    return pl.BlockSpec(shape, lambda *args, _n=n: (0,) * _n)


def _pick_tile(total, target, quantum):
    """Largest t <= target with total % t == 0 and t % quantum == 0, else total."""
    if total <= target:
        return total
    t = (target // quantum) * quantum
    while t >= quantum:
        if total % t == 0:
            return t
        t -= quantum
    return total


def _vmem_limit_bytes(fraction=0.6):
    """Scoped-VMEM cap derived from the actual chip (<=~40 MiB on v7x,
    ~77 MiB on v5e/v6e) instead of a hard-coded 48 MiB."""
    try:
        cap = int(pltpu.get_tpu_info().vmem_capacity_bytes)
    except Exception:  # query unavailable -> conservative (v7x physical) value
        cap = 64 * 1024 * 1024
    return max(16 * 1024 * 1024, int(cap * fraction))


# ---------------------------------------------------------------------------
# kernel 1: qkv = norm1(x) @ Wqkv + b   (rows of B*N tiled, MXU-height tiles)
# ---------------------------------------------------------------------------
def _ln_qkv_kernel(x_ref, g_ref, b_ref, wqkv_ref, bqkv_ref, q_ref, kv_ref, *,
                   embed_dim, scale):
    C = embed_dim
    h = _layernorm(x_ref[...], g_ref[0], b_ref[0])
    qkv = jnp.dot(h.astype(jnp.bfloat16), wqkv_ref[...],
                  preferred_element_type=jnp.float32) + bqkv_ref[0]
    # Softmax scale folded into q here (touches B*N*C elems once, not N*N later).
    q_ref[...] = (qkv[:, :C] * scale).astype(jnp.bfloat16)
    kv_ref[...] = qkv[:, C:].astype(jnp.bfloat16)


# ---------------------------------------------------------------------------
# kernel 2: flash attention (online softmax) + out-projection + residual
# ---------------------------------------------------------------------------
def _flash_attn_kernel(x_ref, q_ref, kv_ref, wproj_ref, bproj_ref, o_ref,
                       q_scr, m_scr, l_scr, acc_scr, *, num_heads):
    ki = pl.program_id(2)
    C = x_ref.shape[-1]
    hd = C // num_heads

    @pl.when(ki == 0)
    def _init():
        q_scr[...] = _split_heads(q_ref[0], num_heads, hd)    # (h, tq, hd) bf16
        m_scr[...] = jnp.full_like(m_scr, -jnp.inf)
        l_scr[...] = jnp.zeros_like(l_scr)
        acc_scr[...] = jnp.zeros_like(acc_scr)

    kv = kv_ref[0]                                            # (tk, 2C) bf16
    k = _split_heads(kv[:, :C], num_heads, hd)                # (h, tk, hd) bf16
    v = _split_heads(kv[:, C:], num_heads, hd)

    # Scores for this (q-tile, kv-tile): (h, tq, tk) f32 — bounded by tile
    # sizes, never (h, N, N).
    s = jnp.einsum('hnd,hmd->hnm', q_scr[...], k,
                   preferred_element_type=jnp.float32)

    m_prev = m_scr[...]
    m_new = jnp.maximum(m_prev, s.max(axis=-1, keepdims=True))   # (h, tq, 1)
    alpha = jnp.exp(m_prev - m_new)
    # TODO(synk): on v6e/v7x the EUP supports bf16 exp; p is cast to bf16 for
    # the PV matmul anyway, so a bf16 exp would ~double EUP throughput (kept
    # f32 here so the same kernel stays accurate on v5e).
    p = jnp.exp(s - m_new)
    l_scr[...] = alpha * l_scr[...] + p.sum(axis=-1, keepdims=True)
    pv = jnp.einsum('hnm,hmd->hnd', p.astype(jnp.bfloat16), v,
                    preferred_element_type=jnp.float32)          # (h, tq, hd)
    acc_scr[...] = alpha * acc_scr[...] + pv
    m_scr[...] = m_new

    @pl.when(ki == pl.num_programs(2) - 1)
    def _finalize():
        inv_l = pl.reciprocal(l_scr[...], approx=True)           # (h, tq, 1)
        o = (acc_scr[...] * inv_l).transpose(1, 0, 2)            # (tq, h, hd) f32
        o = o.reshape(o.shape[0], C)
        proj = jnp.dot(o.astype(jnp.bfloat16), wproj_ref[...],
                       preferred_element_type=jnp.float32) + bproj_ref[0]
        o_ref[0] = x_ref[0] + proj


# ---------------------------------------------------------------------------
# kernel 3: y + mlp(norm2(y)), hidden dim streamed through the grid
# ---------------------------------------------------------------------------
def _mlp_kernel(y_ref, g_ref, b_ref, w1_ref, b1_ref, w2_ref, b2_ref, o_ref,
                h2_scr, acc_scr):
    hi = pl.program_id(1)

    @pl.when(hi == 0)
    def _init():
        h2_scr[...] = _layernorm(y_ref[...], g_ref[0],
                                 b_ref[0]).astype(jnp.bfloat16)
        acc_scr[...] = jnp.zeros_like(acc_scr)

    z = jnp.dot(h2_scr[...], w1_ref[...],
                preferred_element_type=jnp.float32) + b1_ref[0]
    z = _gelu_exact(z)
    acc_scr[...] += jnp.dot(z.astype(jnp.bfloat16), w2_ref[...],
                            preferred_element_type=jnp.float32)

    @pl.when(hi == pl.num_programs(1) - 1)
    def _finalize():
        o_ref[...] = y_ref[...] + acc_scr[...] + b2_ref[0]


# ---------------------------------------------------------------------------
# wrapper
# ---------------------------------------------------------------------------
def transformer_block(x, params, num_heads, *,
                      row_tile=256, q_tile=128, kv_tile=128, h_chunk=512):
    B, N, C = x.shape
    H = params["w1"].shape[1]
    assert C % num_heads == 0, "embed_dim must be divisible by num_heads"
    hd = C // num_heads
    scale = hd ** -0.5
    R = B * N

    tr = _pick_tile(R, row_tile, 8)     # rows per MXU tile (B*N folded)
    tq = _pick_tile(N, q_tile, 8)       # query tile
    tk = _pick_tile(N, kv_tile, 8)      # key/value tile
    hc = _pick_tile(H, h_chunk, 128)    # lane-aligned hidden-dim chunk

    # bf16 copies of the matmul weights (half DMA / VMEM bytes, bf16 MXU
    # throughput); LN params and biases stay f32.
    wqkv = params["wqkv"].astype(jnp.bfloat16)
    wproj = params["wproj"].astype(jnp.bfloat16)
    w1 = params["w1"].astype(jnp.bfloat16)
    w2 = params["w2"].astype(jnp.bfloat16)

    vmem_limit = _vmem_limit_bytes()

    # ---------------- kernel 1: LN1 + QKV projection ----------------
    x2d = x.reshape(R, C)
    q2d, kv2d = pl.pallas_call(
        functools.partial(_ln_qkv_kernel, embed_dim=C, scale=scale),
        grid=(R // tr,),
        in_specs=[pl.BlockSpec((tr, C), lambda r: (r, 0)),
                  _const_spec((1, C)), _const_spec((1, C)),
                  _const_spec((C, 3 * C)), _const_spec((1, 3 * C))],
        out_specs=[pl.BlockSpec((tr, C), lambda r: (r, 0)),
                   pl.BlockSpec((tr, 2 * C), lambda r: (r, 0))],
        out_shape=[jax.ShapeDtypeStruct((R, C), jnp.bfloat16),
                   jax.ShapeDtypeStruct((R, 2 * C), jnp.bfloat16)],
        compiler_params=pltpu.CompilerParams(
            dimension_semantics=("parallel",), vmem_limit_bytes=vmem_limit),
        cost_estimate=pl.CostEstimate(
            flops=2 * R * C * 3 * C,
            transcendentals=R,
            bytes_accessed=R * C * 4 + C * 3 * C * 2 + R * 3 * C * 2 + 8 * C * 4),
    )(x2d, params["ln1_g"], params["ln1_b"], wqkv, params["bqkv"])

    q = q2d.reshape(B, N, C)
    kv = kv2d.reshape(B, N, 2 * C)

    # -------- kernel 2: flash attention + out-proj + residual --------
    n_qt, n_kt = N // tq, N // tk
    y = pl.pallas_call(
        functools.partial(_flash_attn_kernel, num_heads=num_heads),
        grid=(B, n_qt, n_kt),
        in_specs=[
            pl.BlockSpec((1, tq, C), lambda b, qi, ki: (b, qi, 0)),      # x (residual)
            pl.BlockSpec((1, tq, C), lambda b, qi, ki: (b, qi, 0)),      # q (scaled bf16)
            pl.BlockSpec((1, tk, 2 * C), lambda b, qi, ki: (b, ki, 0)),  # [k|v] bf16
            _const_spec((C, C)),                                         # Wproj bf16
            _const_spec((1, C)),                                         # bproj f32
        ],
        out_specs=pl.BlockSpec((1, tq, C), lambda b, qi, ki: (b, qi, 0)),
        out_shape=jax.ShapeDtypeStruct((B, N, C), jnp.float32),
        scratch_shapes=[pltpu.VMEM((num_heads, tq, hd), jnp.bfloat16),  # q (head-major)
                        pltpu.VMEM((num_heads, tq, 1), jnp.float32),    # running max
                        pltpu.VMEM((num_heads, tq, 1), jnp.float32),    # running sum
                        pltpu.VMEM((num_heads, tq, hd), jnp.float32)],  # accumulator
        compiler_params=pltpu.CompilerParams(
            dimension_semantics=("parallel", "parallel", "arbitrary"),
            vmem_limit_bytes=vmem_limit),
        cost_estimate=pl.CostEstimate(
            flops=B * (4 * N * N * C + 2 * N * C * C),
            transcendentals=B * num_heads * N * N,
            bytes_accessed=(B * N * C * 4 * 2 + B * N * C * 2
                            + B * N * 2 * C * 2 * n_qt + C * C * 2 + C * 4)),
    )(x, q, kv, wproj, params["bproj"])

    # -------- kernel 3: LN2 + MLP + residual (H streamed in chunks) --------
    y2d = y.reshape(R, C)
    out2d = pl.pallas_call(
        _mlp_kernel,
        grid=(R // tr, H // hc),
        in_specs=[
            pl.BlockSpec((tr, C), lambda r, h: (r, 0)),     # attention output
            _const_spec((1, C)), _const_spec((1, C)),       # ln2 gamma / beta
            pl.BlockSpec((C, hc), lambda r, h: (0, h)),     # W1 column chunk
            pl.BlockSpec((1, hc), lambda r, h: (0, h)),     # b1 chunk
            pl.BlockSpec((hc, C), lambda r, h: (h, 0)),     # W2 row chunk
            _const_spec((1, C)),                            # b2
        ],
        out_specs=pl.BlockSpec((tr, C), lambda r, h: (r, 0)),
        out_shape=jax.ShapeDtypeStruct((R, C), jnp.float32),
        scratch_shapes=[pltpu.VMEM((tr, C), jnp.bfloat16),   # norm2(y) cache
                        pltpu.VMEM((tr, C), jnp.float32)],   # MLP accumulator
        compiler_params=pltpu.CompilerParams(
            dimension_semantics=("parallel", "arbitrary"),
            vmem_limit_bytes=vmem_limit),
        cost_estimate=pl.CostEstimate(
            flops=4 * R * C * H,
            transcendentals=R * H + R,
            bytes_accessed=R * C * 4 * 2 + 2 * C * H * 2 + (H + 4 * C) * 4),
    )(y2d, params["ln2_g"], params["ln2_b"], w1, params["b1"], w2, params["b2"])

    return out2d.reshape(B, N, C)


# ---------------------------------------------------------------------------
# pure-JAX (f32) reference matching the PyTorch forward exactly
# ---------------------------------------------------------------------------
def reference_transformer_block(x, params, num_heads):
    def ln(t, g, b):
        mean = t.mean(-1, keepdims=True)
        var = ((t - mean) ** 2).mean(-1, keepdims=True)
        return (t - mean) / jnp.sqrt(var + EPS) * g + b

    B, N, C = x.shape
    hd = C // num_heads

    h = ln(x, params["ln1_g"][0], params["ln1_b"][0])
    qkv = h @ params["wqkv"] + params["bqkv"][0]
    qkv = qkv.reshape(B, N, 3, num_heads, hd).transpose(2, 0, 3, 1, 4)
    q, k, v = qkv[0], qkv[1], qkv[2]
    attn = jax.nn.softmax((q @ jnp.swapaxes(k, -2, -1)) * hd ** -0.5, axis=-1)
    o = (attn @ v).transpose(0, 2, 1, 3).reshape(B, N, C)
    o = o @ params["wproj"] + params["bproj"][0]
    x = x + o

    h2 = ln(x, params["ln2_g"][0], params["ln2_b"][0])
    z = jax.nn.gelu(h2 @ params["w1"] + params["b1"][0], approximate=False)
    z = z @ params["w2"] + params["b2"][0]
    return x + z


def init_params(key, embed_dim, num_heads, mlp_ratio=4.0):
    C = embed_dim
    H = int(embed_dim * mlp_ratio)
    ks = jax.random.split(key, 8)
    s = 0.02
    return {
        "ln1_g": jnp.ones((1, C), jnp.float32),
        "ln1_b": jnp.zeros((1, C), jnp.float32),
        "wqkv": s * jax.random.normal(ks[0], (C, 3 * C), jnp.float32),
        "bqkv": s * jax.random.normal(ks[1], (1, 3 * C), jnp.float32),
        "wproj": s * jax.random.normal(ks[2], (C, C), jnp.float32),
        "bproj": s * jax.random.normal(ks[3], (1, C), jnp.float32),
        "ln2_g": jnp.ones((1, C), jnp.float32),
        "ln2_b": jnp.zeros((1, C), jnp.float32),
        "w1": s * jax.random.normal(ks[4], (C, H), jnp.float32),
        "b1": s * jax.random.normal(ks[5], (1, H), jnp.float32),
        "w2": s * jax.random.normal(ks[6], (H, C), jnp.float32),
        "b2": s * jax.random.normal(ks[7], (1, C), jnp.float32),
    }


if __name__ == "__main__":
    # Small but structurally complete config: C = 128 (lane-dense), 4 heads,
    # H = 512.  q/kv tiles of 8 give a (B=2, 2 q-tiles, 2 kv-tiles) flash grid
    # (online-softmax recurrence exercised across kv steps) and h_chunk = 256
    # streams the MLP hidden dim in 2 grid steps.
    B, N, C, num_heads = 2, 16, 128, 4

    key = jax.random.PRNGKey(0)
    k_x, k_p = jax.random.split(key)
    x = jax.random.normal(k_x, (B, N, C), jnp.float32)
    params = init_params(k_p, C, num_heads, mlp_ratio=4.0)

    out = transformer_block(x, params, num_heads,
                            q_tile=8, kv_tile=8, h_chunk=256)
    out = jax.block_until_ready(out)

    ref = reference_transformer_block(x, params, num_heads)
    assert out.shape == (B, N, C)
    # bf16 matmul operands + EUP approx reciprocal vs an all-f32 reference:
    # expected deviation is a few 1e-3; 2e-2 tolerance is comfortably safe.
    err = jnp.max(jnp.abs(out - ref))
    assert jnp.allclose(out, ref, rtol=2e-2, atol=2e-2), f"max abs diff {err}"

    print("KERNEL_OK")
</pallas_src>

<mosaic_0001>
module attributes {stable_mosaic.version = 11 : i64} {
  func.func @_ln_qkv_kernel(%arg0: i32, %arg1: memref<32x128xf32, #tpu.memory_space<vmem>>, %arg2: memref<1x128xf32, #tpu.memory_space<vmem>>, %arg3: memref<1x128xf32, #tpu.memory_space<vmem>>, %arg4: memref<128x384xbf16, #tpu.memory_space<vmem>>, %arg5: memref<1x384xf32, #tpu.memory_space<vmem>>, %arg6: memref<32x128xbf16, #tpu.memory_space<vmem>>, %arg7: memref<32x256xbf16, #tpu.memory_space<vmem>>) attributes {dimension_semantics = [#tpu.dimension_semantics<parallel>], iteration_bounds = array<i64: 1>, scalar_prefetch = 0 : i64, scratch_operands = 0 : i64, tpu.core_type = #tpu.core_type<tc>, window_params = [{transform_indices = @transform_0, window_bounds = array<i64: 32, 128>}, {pipeline_mode = #tpu.pipeline_mode<synchronous>, transform_indices = @transform_1, window_bounds = array<i64: 1, 128>}, {pipeline_mode = #tpu.pipeline_mode<synchronous>, transform_indices = @transform_2, window_bounds = array<i64: 1, 128>}, {pipeline_mode = #tpu.pipeline_mode<synchronous>, transform_indices = @transform_3, window_bounds = array<i64: 128, 384>}, {pipeline_mode = #tpu.pipeline_mode<synchronous>, transform_indices = @transform_4, window_bounds = array<i64: 1, 384>}, {transform_indices = @transform_5, window_bounds = array<i64: 32, 128>}, {transform_indices = @transform_6, window_bounds = array<i64: 32, 256>}]} {
    %c0 = arith.constant 0 : index
    %c0_0 = arith.constant 0 : index
    %0 = vector.load %arg1[%c0, %c0_0] : memref<32x128xf32, #tpu.memory_space<vmem>>, vector<32x128xf32>
    %c0_1 = arith.constant 0 : index
    %c0_2 = arith.constant 0 : index
    %1 = vector.load %arg2[%c0_1, %c0_2] : memref<1x128xf32, #tpu.memory_space<vmem>>, vector<1x128xf32>
    %2 = vector.shape_cast %1 : vector<1x128xf32> to vector<128xf32>
    %c0_3 = arith.constant 0 : index
    %c0_4 = arith.constant 0 : index
    %3 = vector.load %arg3[%c0_3, %c0_4] : memref<1x128xf32, #tpu.memory_space<vmem>>, vector<1x128xf32>
    %4 = vector.shape_cast %3 : vector<1x128xf32> to vector<128xf32>
    %cst = arith.constant dense<0.000000e+00> : vector<32xf32>
    %5 = vector.multi_reduction <add>, %0, %cst [1] : vector<32x128xf32> to vector<32xf32>
    %6 = vector.shape_cast %5 : vector<32xf32> to vector<32x1xf32>
    %cst_5 = arith.constant 1.280000e+02 : f32
    %7 = vector.broadcast %cst_5 : f32 to vector<32x1xf32>
    %8 = arith.divf %6, %7 : vector<32x1xf32>
    %9 = vector.broadcast %8 : vector<32x1xf32> to vector<32x128xf32>
    %10 = arith.subf %0, %9 : vector<32x128xf32>
    %11 = arith.mulf %10, %10 : vector<32x128xf32>
    %cst_6 = arith.constant dense<0.000000e+00> : vector<32xf32>
    %12 = vector.multi_reduction <add>, %11, %cst_6 [1] : vector<32x128xf32> to vector<32xf32>
    %13 = vector.shape_cast %12 : vector<32xf32> to vector<32x1xf32>
    %cst_7 = arith.constant 1.280000e+02 : f32
    %14 = vector.broadcast %cst_7 : f32 to vector<32x1xf32>
    %15 = arith.divf %13, %14 : vector<32x1xf32>
    %16 = vector.broadcast %8 : vector<32x1xf32> to vector<32x128xf32>
    %17 = arith.subf %0, %16 : vector<32x128xf32>
    %cst_8 = arith.constant 9.99999974E-6 : f32
    %18 = vector.broadcast %cst_8 : f32 to vector<32x1xf32>
    %19 = arith.addf %15, %18 : vector<32x1xf32>
    %20 = math.rsqrt %19 : vector<32x1xf32>
    %21 = vector.broadcast %20 : vector<32x1xf32> to vector<32x128xf32>
    %22 = arith.mulf %17, %21 : vector<32x128xf32>
    %23 = vector.shape_cast %2 : vector<128xf32> to vector<1x128xf32>
    %24 = vector.broadcast %23 : vector<1x128xf32> to vector<32x128xf32>
    %25 = arith.mulf %22, %24 : vector<32x128xf32>
    %26 = vector.shape_cast %4 : vector<128xf32> to vector<1x128xf32>
    %27 = vector.broadcast %26 : vector<1x128xf32> to vector<32x128xf32>
    %28 = arith.addf %25, %27 : vector<32x128xf32>
    %29 = arith.truncf %28 : vector<32x128xf32> to vector<32x128xbf16>
    %c0_9 = arith.constant 0 : index
    %c0_10 = arith.constant 0 : index
    %30 = vector.load %arg4[%c0_9, %c0_10] : memref<128x384xbf16, #tpu.memory_space<vmem>>, vector<128x384xbf16>
    %cst_11 = arith.constant dense<0.000000e+00> : vector<32x384xf32>
    %31 = tpu.matmul %29, %30, %cst_11 {dimension_numbers = #tpu.dot_dimension_numbers<[1], [0], [0], [1], [0, 0, 1, 1], [], []>} : vector<32x128xbf16>, vector<128x384xbf16>, vector<32x384xf32> -> vector<32x384xf32>
    %c0_12 = arith.constant 0 : index
    %c0_13 = arith.constant 0 : index
    %32 = vector.load %arg5[%c0_12, %c0_13] : memref<1x384xf32, #tpu.memory_space<vmem>>, vector<1x384xf32>
    %33 = vector.shape_cast %32 : vector<1x384xf32> to vector<384xf32>
    %34 = vector.shape_cast %33 : vector<384xf32> to vector<1x384xf32>
    %35 = vector.broadcast %34 : vector<1x384xf32> to vector<32x384xf32>
    %36 = arith.addf %31, %35 : vector<32x384xf32>
    %37 = vector.extract_strided_slice %36 {offsets = [0, 0], sizes = [32, 128], strides = [1, 1]} : vector<32x384xf32> to vector<32x128xf32>
    %cst_14 = arith.constant 0.176776692 : f32
    %38 = vector.broadcast %cst_14 : f32 to vector<32x128xf32>
    %39 = arith.mulf %37, %38 : vector<32x128xf32>
    %40 = arith.truncf %39 : vector<32x128xf32> to vector<32x128xbf16>
    %c0_15 = arith.constant 0 : index
    %c0_16 = arith.constant 0 : index
    %41 = vector.load %arg6[%c0_15, %c0_16] : memref<32x128xbf16, #tpu.memory_space<vmem>>, vector<32x128xbf16>
    tpu.vector_store %arg6[%c0_15, %c0_16], %40 {strides = array<i32>} : memref<32x128xbf16, #tpu.memory_space<vmem>>, vector<32x128xbf16>,
    %42 = vector.extract_strided_slice %36 {offsets = [0, 128], sizes = [32, 256], strides = [1, 1]} : vector<32x384xf32> to vector<32x256xf32>
    %43 = arith.truncf %42 : vector<32x256xf32> to vector<32x256xbf16>
    %c0_17 = arith.constant 0 : index
    %c0_18 = arith.constant 0 : index
    %44 = vector.load %arg7[%c0_17, %c0_18] : memref<32x256xbf16, #tpu.memory_space<vmem>>, vector<32x256xbf16>
    tpu.vector_store %arg7[%c0_17, %c0_18], %43 {strides = array<i32>} : memref<32x256xbf16, #tpu.memory_space<vmem>>, vector<32x256xbf16>,
    return
  }
  func.func @transform_0(%arg0: i32) -> (i32, i32) {
    %c0_i32 = arith.constant 0 : i32
    %c0_i32_0 = arith.constant 0 : i32
    return %arg0, %c0_i32 : i32, i32
  }
  func.func @transform_1(%arg0: i32) -> (i32, i32) {
    %c0_i32 = arith.constant 0 : i32
    %c0_i32_0 = arith.constant 0 : i32
    %c0_i32_1 = arith.constant 0 : i32
    return %c0_i32, %c0_i32_0 : i32, i32
  }
  func.func @transform_2(%arg0: i32) -> (i32, i32) {
    %c0_i32 = arith.constant 0 : i32
    %c0_i32_0 = arith.constant 0 : i32
    %c0_i32_1 = arith.constant 0 : i32
    return %c0_i32, %c0_i32_0 : i32, i32
  }
  func.func @transform_3(%arg0: i32) -> (i32, i32) {
    %c0_i32 = arith.constant 0 : i32
    %c0_i32_0 = arith.constant 0 : i32
    %c0_i32_1 = arith.constant 0 : i32
    return %c0_i32, %c0_i32_0 : i32, i32
  }
  func.func @transform_4(%arg0: i32) -> (i32, i32) {
    %c0_i32 = arith.constant 0 : i32
    %c0_i32_0 = arith.constant 0 : i32
    %c0_i32_1 = arith.constant 0 : i32
    return %c0_i32, %c0_i32_0 : i32, i32
  }
  func.func @transform_5(%arg0: i32) -> (i32, i32) {
    %c0_i32 = arith.constant 0 : i32
    %c0_i32_0 = arith.constant 0 : i32
    return %arg0, %c0_i32 : i32, i32
  }
  func.func @transform_6(%arg0: i32) -> (i32, i32) {
    %c0_i32 = arith.constant 0 : i32
    %c0_i32_0 = arith.constant 0 : i32
    return %arg0, %c0_i32 : i32, i32
  }
}

</mosaic_0001>

<llo_original>
// kernel: tpu_custom_call.1
$region0: #{tpu_custom_call.1}
  #allocation0 [shape = 'u32[]', space=smem, size = 0x4, offset = 0x4, fixed_abs, tag = 'smem constant byte address 0x4 - core index']
  #allocation1 [shape = 'u32[144,128]{1,0:T(1,128)}', space=vmem, size = 0x12000, scoped, tag = 'internal scratch']
  %s0 = inlined_call_operand.hbm [shape: f32[32,128], index: 0, kind: input, shape index: {}]
  %s1 = inlined_call_operand.vmem [shape: f32[1,128], index: 1, kind: input, shape index: {}]
  %s2 = inlined_call_operand.vmem [shape: f32[1,128], index: 2, kind: input, shape index: {}]
  %s3 = inlined_call_operand.hbm [shape: bf16[128,384], index: 3, kind: input, shape index: {}]
  %s4 = inlined_call_operand.vmem [shape: f32[1,384], index: 4, kind: input, shape index: {}]
  %s5 = inlined_call_operand.hbm [shape: bf16[32,128], index: 5, kind: output, shape index: {0}]
  %s6 = inlined_call_operand.hbm [shape: bf16[32,256], index: 6, kind: output, shape index: {1}]
  %7 = xla_tuple %s5, %s6
  %s8 = sld [smem:[#allocation0]]
  $region46: #{tpu_custom_call.1} parent=0
    _
  %s10 = ssub.s32 1, %s8
  %s11 = scalar_select 0, %s10, %s8
  $region1: #{tpu_custom_call.1} parent=0
    #allocation2 [shape = 'u8[16384]{0}', space=vmem, size = 0x4000, scoped, tag = 'input window, operand 0, single buffered']
    #allocation3 [shape = 's32[1]{0}', space=sflag, size = 0x4, scoped, tag = 'scoped memory for tpu_custom_call.1']
    #allocation4 [shape = 's32[1]{0}', space=sflag, size = 0x4, scoped, tag = 'scoped memory for tpu_custom_call.1']
    #allocation5 [shape = 'u8[98304]{0}', space=vmem, size = 0x18000, scoped, tag = 'input window, operand 3, single buffered']
    #allocation6 [shape = 's32[1]{0}', space=sflag, size = 0x4, scoped, tag = 'scoped memory for tpu_custom_call.1']
    #allocation7 [shape = 'u8[8192]{0}', space=vmem, size = 0x2000, scoped, tag = 'output window, operand 0, single buffered']
    #allocation8 [shape = 'u8[16384]{0}', space=vmem, size = 0x4000, scoped, tag = 'output window, operand 1, single buffered']
    #allocation9 [shape = 's32[1]{0}', space=sflag, size = 0x4, scoped, tag = 'scoped memory for tpu_custom_call.1']
    %12 = vsyncpa [#allocation3], 0
    %13 = vsyncpa [#allocation6], 0
    %14 = vsyncpa [#allocation4], 0
    %15 = vsyncpa [#allocation9], 0
    // Predicated region
    $region2: #{tpu_custom_call.1} parent=1 // pred_check
      _
    $region3: #{tpu_custom_call.1} parent=1 // pred_check_branch
      %17 = sbr.rel (0) target = $region5
    $region4: #{tpu_custom_call.1} parent=1 // pred_region
      %s19 = ssub.s32 512, 512
      %20 = vsyncadd [#allocation3], %s19
      %s21 = sshll.u32 [#allocation2], 4
      %s22 = int_to_ptr.vmem [resolvable:$true] %s21
      %27 = dma.hbm_to_vmem [thread:$0]  %s0, 512, %s22, [#allocation3], 128, 128, 8
    $region5: #{tpu_custom_call.1} parent=1 // pred_fallthru
      _
    // Predicated region
    $region6: #{tpu_custom_call.1} parent=1 // pred_check
      _
    $region7: #{tpu_custom_call.1} parent=1 // pred_check_branch
      %29 = sbr.rel (0) target = $region9
    $region8: #{tpu_custom_call.1} parent=1 // pred_region
      _
    $region9: #{tpu_custom_call.1} parent=1 // pred_fallthru
      _
    // Predicated region
    $region10: #{tpu_custom_call.1} parent=1 // pred_check
      _
    $region11: #{tpu_custom_call.1} parent=1 // pred_check_branch
      %31 = sbr.rel (0) target = $region13
    $region12: #{tpu_custom_call.1} parent=1 // pred_region
      _
    $region13: #{tpu_custom_call.1} parent=1 // pred_fallthru
      _
    // Predicated region
    $region14: #{tpu_custom_call.1} parent=1 // pred_check
      _
    $region15: #{tpu_custom_call.1} parent=1 // pred_check_branch
      %33 = sbr.rel (0) target = $region17
    $region16: #{tpu_custom_call.1} parent=1 // pred_region
      %s35 = ssub.s32 3072, 3072
      %36 = vsyncadd [#allocation6], %s35
      %s37 = sshll.u32 [#allocation5], 4
      %s38 = int_to_ptr.vmem [resolvable:$true] %s37
      %43 = dma.hbm_to_vmem [thread:$0]  %s3, 3072, %s38, [#allocation6], 192, 192, 12
    $region17: #{tpu_custom_call.1} parent=1 // pred_fallthru
      _
    // Predicated region
    $region18: #{tpu_custom_call.1} parent=1 // pred_check
      _
    $region19: #{tpu_custom_call.1} parent=1 // pred_check_branch
      %45 = sbr.rel (0) target = $region21
    $region20: #{tpu_custom_call.1} parent=1 // pred_region
      _
    $region21: #{tpu_custom_call.1} parent=1 // pred_fallthru
      _
    // Predicated region
    $region22: #{tpu_custom_call.1} parent=1 // pred_check
      _
    $region23: #{tpu_custom_call.1} parent=1 // pred_check_branch
      %47 = sbr.rel (0) target = $region25
    $region24: #{tpu_custom_call.1} parent=1 // pred_region
      %48 = dma.done [#allocation3], 512
    $region25: #{tpu_custom_call.1} parent=1 // pred_fallthru
      _
    // Predicated region
    $region26: #{tpu_custom_call.1} parent=1 // pred_check
      _
    $region27: #{tpu_custom_call.1} parent=1 // pred_check_branch
      %50 = sbr.rel (0) target = $region29
    $region28: #{tpu_custom_call.1} parent=1 // pred_region
      %51 = dma.done [#allocation6], 3072
    $region29: #{tpu_custom_call.1} parent=1 // pred_fallthru
      _
    %v53 = vld [vmem:[#allocation2] sm:$0xff]
    %v54 = vld [vmem:[#allocation2 + $0x8] sm:$0xff]
    %v55 = vld [vmem:[#allocation2 + $0x10] sm:$0xff]
    %v56 = vld [vmem:[#allocation2 + $0x18] sm:$0xff]
    %v57 = vld [vmem:[%s1] sm:$0x1]
    %v58 = vld [vmem:[%s2] sm:$0x1]
    %59 = vadd.xlane.f32.xlu0 %v53
    %v60 = vpop.xlane.xlu0 %59
    %61 = vadd.xlane.f32.xlu0 %v54
    %v62 = vpop.xlane.xlu0 %61
    %63 = vadd.xlane.f32.xlu0 %v55
    %v64 = vpop.xlane.xlu0 %63
    %65 = vadd.xlane.f32.xlu0 %v56
    %v66 = vpop.xlane.xlu0 %65
    %v67 = vrcp.pop 128.0
    %v68 = vmul.f32 %v60, %v67
    %v69 = vmul.f32 %v62, %v67
    %v70 = vmul.f32 %v64, %v67
    %v71 = vmul.f32 %v66, %v67
    %v72 = vsub.f32 %v53, %v68
    %v73 = vsub.f32 %v54, %v69
    %v74 = vsub.f32 %v55, %v70
    %v75 = vsub.f32 %v56, %v71
    %v76 = vmul.f32 %v72, %v72
    %v77 = vmul.f32 %v73, %v73
    %v78 = vmul.f32 %v74, %v74
    %v79 = vmul.f32 %v75, %v75
    %80 = vadd.xlane.f32.xlu0 %v76
    %v81 = vpop.xlane.xlu0 %80
    %82 = vadd.xlane.f32.xlu0 %v77
    %v83 = vpop.xlane.xlu0 %82
    %84 = vadd.xlane.f32.xlu0 %v78
    %v85 = vpop.xlane.xlu0 %84
    %86 = vadd.xlane.f32.xlu0 %v79
    %v87 = vpop.xlane.xlu0 %86
    %v88 = vmul.f32 %v81, %v67
    %v89 = vmul.f32 %v83, %v67
    %v90 = vmul.f32 %v85, %v67
    %v91 = vmul.f32 %v87, %v67
    %v92 = vadd.f32 %v88, 1e-05
    %v93 = vadd.f32 %v89, 1e-05
    %v94 = vadd.f32 %v90, 1e-05
    %v95 = vadd.f32 %v91, 1e-05
    %v96 = vrsqrt.pop %v92
    %v97 = vrsqrt.pop %v93
    %v98 = vrsqrt.pop %v94
    %v99 = vrsqrt.pop %v95
    %v100 = vmul.f32 %v72, %v96
    %v101 = vmul.f32 %v73, %v97
    %v102 = vmul.f32 %v74, %v98
    %v103 = vmul.f32 %v75, %v99
    %v105 = vlaneseq
    %v106 = vshrl.u32 %v105, 7
    %v107 = vsub.s32 0, %v106
    %v108 = vrot.slane %v57, %v107
    %v110 = vmul.f32 %v100, %v108
    %v111 = vmul.f32 %v101, %v108
    %v112 = vmul.f32 %v102, %v108
    %v113 = vmul.f32 %v103, %v108
    %v115 = vlaneseq
    %v116 = vshrl.u32 %v115, 7
    %v117 = vsub.s32 0, %v116
    %v118 = vrot.slane %v58, %v117
    %v120 = vadd.f32 %v110, %v118
    %v121 = vadd.f32 %v111, %v118
    %v122 = vadd.f32 %v112, %v118
    %v123 = vadd.f32 %v113, %v118
    %v124 = vpack.c.bf16 %v121, %v120
    %v125 = vpack.c.bf16 %v123, %v122
    %v126 = vld [vmem:[#allocation5] sm:$0xff]
    %v127 = vld [vmem:[#allocation5 + $0x8] sm:$0xf]
    %v128 = vld [vmem:[#allocation5 + $0xc] sm:$0xff]
    %v129 = vld [vmem:[#allocation5 + $0x14] sm:$0xf]
    %v130 = vld [vmem:[#allocation5 + $0x18] sm:$0xff]
    %v131 = vld [vmem:[#allocation5 + $0x20] sm:$0xf]
    %v132 = vld [vmem:[#allocation5 + $0x24] sm:$0xff]
    %v133 = vld [vmem:[#allocation5 + $0x2c] sm:$0xf]
    %v134 = vld [vmem:[#allocation5 + $0x30] sm:$0xff]
    %v135 = vld [vmem:[#allocation5 + $0x38] sm:$0xf]
    %v136 = vld [vmem:[#allocation5 + $0x3c] sm:$0xff]
    %v137 = vld [vmem:[#allocation5 + $0x44] sm:$0xf]
    %v138 = vld [vmem:[#allocation5 + $0x48] sm:$0xff]
    %v139 = vld [vmem:[#allocation5 + $0x50] sm:$0xf]
    %v140 = vld [vmem:[#allocation5 + $0x54] sm:$0xff]
    %v141 = vld [vmem:[#allocation5 + $0x5c] sm:$0xf]
    %v142 = vld [vmem:[#allocation5 + $0x60] sm:$0xff]
    %v143 = vld [vmem:[#allocation5 + $0x68] sm:$0xf]
    %v144 = vld [vmem:[#allocation5 + $0x6c] sm:$0xff]
    %v145 = vld [vmem:[#allocation5 + $0x74] sm:$0xf]
    %v146 = vld [vmem:[#allocation5 + $0x78] sm:$0xff]
    %v147 = vld [vmem:[#allocation5 + $0x80] sm:$0xf]
    %v148 = vld [vmem:[#allocation5 + $0x84] sm:$0xff]
    %v149 = vld [vmem:[#allocation5 + $0x8c] sm:$0xf]
    %v150 = vld [vmem:[#allocation5 + $0x90] sm:$0xff]
    %v151 = vld [vmem:[#allocation5 + $0x98] sm:$0xf]
    %v152 = vld [vmem:[#allocation5 + $0x9c] sm:$0xff]
    %v153 = vld [vmem:[#allocation5 + $0xa4] sm:$0xf]
    %v154 = vld [vmem:[#allocation5 + $0xa8] sm:$0xff]
    %v155 = vld [vmem:[#allocation5 + $0xb0] sm:$0xf]
    %v156 = vld [vmem:[#allocation5 + $0xb4] sm:$0xff]
    %v157 = vld [vmem:[#allocation5 + $0xbc] sm:$0xf]
    %v158 = vld [vmem:[%s4] sm:$0x7]
    %v160 = vlaneseq
    %v161 = vshrl.u32 %v160, 7
    %v162 = vsub.s32 0, %v161
    %v163 = vrot.slane %v158, %v162
    %v164 = vlaneseq
    %v165 = vshrl.u32 %v164, 7
    %v166 = vsub.s32 1, %v165
    %v167 = vrot.slane %v158, %v166
    %v168 = vlaneseq
    %v169 = vshrl.u32 %v168, 7
    %v170 = vsub.s32 2, %v169
    %v171 = vrot.slane %v158, %v170
    %v207 = vunpack.c.l.b16 %v126
    %v208 = vunpack.c.h.b16 %v126
    %v209 = vunpack.c.l.b16 %v127
    %v210 = vunpack.c.l.b16 %v128
    %v211 = vunpack.c.h.b16 %v128
    %v212 = vunpack.c.l.b16 %v129
    %v213 = vunpack.c.l.b16 %v130
    %v214 = vunpack.c.h.b16 %v130
    %v215 = vunpack.c.l.b16 %v131
    %v216 = vunpack.c.l.b16 %v132
    %v217 = vunpack.c.h.b16 %v132
    %v218 = vunpack.c.l.b16 %v133
    %v219 = vunpack.c.l.b16 %v134
    %v220 = vunpack.c.h.b16 %v134
    %v221 = vunpack.c.l.b16 %v135
    %v222 = vunpack.c.l.b16 %v136
    %v223 = vunpack.c.h.b16 %v136
    %v224 = vunpack.c.l.b16 %v137
    %v225 = vunpack.c.l.b16 %v138
    %v226 = vunpack.c.h.b16 %v138
    %v227 = vunpack.c.l.b16 %v139
    %v228 = vunpack.c.l.b16 %v140
    %v229 = vunpack.c.h.b16 %v140
    %v230 = vunpack.c.l.b16 %v141
    %v231 = vunpack.c.l.b16 %v142
    %v232 = vunpack.c.h.b16 %v142
    %v233 = vunpack.c.l.b16 %v143
    %v234 = vunpack.c.l.b16 %v144
    %v235 = vunpack.c.h.b16 %v144
    %v236 = vunpack.c.l.b16 %v145
    %v237 = vunpack.c.l.b16 %v146
    %v238 = vunpack.c.h.b16 %v146
    %v239 = vunpack.c.l.b16 %v147
    %v240 = vunpack.c.l.b16 %v148
    %v241 = vunpack.c.h.b16 %v148
    %v242 = vunpack.c.l.b16 %v149
    %v243 = vunpack.c.l.b16 %v150
    %v244 = vunpack.c.h.b16 %v150
    %v245 = vunpack.c.l.b16 %v151
    %v246 = vunpack.c.l.b16 %v152
    %v247 = vunpack.c.h.b16 %v152
    %v248 = vunpack.c.l.b16 %v153
    %v249 = vunpack.c.l.b16 %v154
    %v250 = vunpack.c.h.b16 %v154
    %v251 = vunpack.c.l.b16 %v155
    %v252 = vunpack.c.l.b16 %v156
    %v253 = vunpack.c.h.b16 %v156
    %v254 = vunpack.c.l.b16 %v157
    %v255 = vpack.c.b16 %v210, %v207
    %v256 = vpack.c.b16 %v211, %v208
    %v257 = vpack.c.b16 %v212, %v209
    %v258 = vpack.c.b16 %v216, %v213
    %v259 = vpack.c.b16 %v217, %v214
    %v260 = vpack.c.b16 %v218, %v215
    %v261 = vpack.c.b16 %v222, %v219
    %v262 = vpack.c.b16 %v223, %v220
    %v263 = vpack.c.b16 %v224, %v221
    %v264 = vpack.c.b16 %v228, %v225
    %v265 = vpack.c.b16 %v229, %v226
    %v266 = vpack.c.b16 %v230, %v227
    %v267 = vpack.c.b16 %v234, %v231
    %v268 = vpack.c.b16 %v235, %v232
    %v269 = vpack.c.b16 %v236, %v233
    %v270 = vpack.c.b16 %v240, %v237
    %v271 = vpack.c.b16 %v241, %v238
    %v272 = vpack.c.b16 %v242, %v239
    %v273 = vpack.c.b16 %v246, %v243
    %v274 = vpack.c.b16 %v247, %v244
    %v275 = vpack.c.b16 %v248, %v245
    %v276 = vpack.c.b16 %v252, %v249
    %v277 = vpack.c.b16 %v253, %v250
    %v278 = vpack.c.b16 %v254, %v251
    %303 = vmatprep.subr.bf16.mxu0 %v277
    %304 = vmatpush1.bf16.msra.mxu0 %v276
    %305 = vmatprep.subr.bf16.mxu0 %v274
    %306 = vmatpush1.bf16.msra.mxu0 %v273
    %307 = vmatprep.subr.bf16.mxu0 %v271
    %308 = vmatpush1.bf16.msra.mxu0 %v270
    %309 = vmatprep.subr.bf16.mxu0 %v268
    %310 = vmatpush1.bf16.msra.mxu0 %v267
    %311 = vmatprep.subr.bf16.mxu0 %v265
    %312 = vmatpush1.bf16.msra.mxu0 %v264
    %313 = vmatprep.subr.bf16.mxu0 %v262
    %314 = vmatpush1.bf16.msra.mxu0 %v261
    %315 = vmatprep.subr.bf16.mxu0 %v259
    %316 = vmatpush1.bf16.msra.mxu0 %v258
    %317 = vmatprep.subr.bf16.mxu0 %v256
    %318 = vmatpush1.bf16.msra.mxu0 %v255
    %319 = vmatprep.subr.bf16.mxu0 0
    %320 = vmatpush2.bf16.msra.mxu0 0
    %321 = vmatprep.subr.bf16.mxu0 0
    %322 = vmatpush2.bf16.msra.mxu0 0
    %323 = vmatprep.subr.bf16.mxu0 0
    %324 = vmatpush2.bf16.msra.mxu0 0
    %325 = vmatprep.subr.bf16.mxu0 0
    %326 = vmatpush2.bf16.msra.mxu0 0
    %327 = vmatprep.subr.bf16.mxu0 0
    %328 = vmatpush2.bf16.msra.mxu0 0
    %329 = vmatprep.subr.bf16.mxu0 0
    %330 = vmatpush2.bf16.msra.mxu0 0
    %331 = vmatprep.subr.bf16.mxu0 0
    %332 = vmatpush2.bf16.msra.mxu0 0
    %333 = vmatprep.subr.bf16.mxu0 0
    %334 = vmatpush2.bf16.msra.mxu0 0
    %335 = vmatprep.mubr.bf16.mxu0 0
    %336 = vmatmul.mubr.bf16.gmra.mxu0 %v124
    %v337 = vpop.f32.mrf.mxu0
    %v338 = vadd.f32 %v163, %v337
    %v339 = vpop.f32.mrf.mxu0
    %v340 = vadd.f32 %v167, %v339
    %v341 = vpop.f32.mrf.mxu0
    %v342 = vadd.f32 %v163, %v341
    %v343 = vpop.f32.mrf.mxu0
    %v344 = vadd.f32 %v167, %v343
    %345 = vmatprep.mubr.bf16.mxu0 0
    %346 = vmatmul.mubr.bf16.gmra.mxu0 %v125
    %v347 = vpop.f32.mrf.mxu0
    %v348 = vadd.f32 %v163, %v347
    %v349 = vpop.f32.mrf.mxu0
    %v350 = vadd.f32 %v167, %v349
    %v351 = vpop.f32.mrf.mxu0
    %v352 = vadd.f32 %v163, %v351
    %v353 = vpop.f32.mrf.mxu0
    %v354 = vadd.f32 %v167, %v353
    %355 = vdwg.mxu0
    %356 = vmatprep.subr.bf16.mxu0 0
    %357 = vmatpush1.bf16.msra.mxu0 %v278
    %358 = vmatprep.subr.bf16.mxu0 0
    %359 = vmatpush1.bf16.msra.mxu0 %v275
    %360 = vmatprep.subr.bf16.mxu0 0
    %361 = vmatpush1.bf16.msra.mxu0 %v272
    %362 = vmatprep.subr.bf16.mxu0 0
    %363 = vmatpush1.bf16.msra.mxu0 %v269
    %364 = vmatprep.subr.bf16.mxu0 0
    %365 = vmatpush1.bf16.msra.mxu0 %v266
    %366 = vmatprep.subr.bf16.mxu0 0
    %367 = vmatpush1.bf16.msra.mxu0 %v263
    %368 = vmatprep.subr.bf16.mxu0 0
    %369 = vmatpush1.bf16.msra.mxu0 %v260
    %370 = vmatprep.subr.bf16.mxu0 0
    %371 = vmatpush1.bf16.msra.mxu0 %v257
    %372 = vmatprep.subr.bf16.mxu0 0
    %373 = vmatpush2.bf16.msra.mxu0 0
    %374 = vmatprep.subr.bf16.mxu0 0
    %375 = vmatpush2.bf16.msra.mxu0 0
    %376 = vmatprep.subr.bf16.mxu0 0
    %377 = vmatpush2.bf16.msra.mxu0 0
    %378 = vmatprep.subr.bf16.mxu0 0
    %379 = vmatpush2.bf16.msra.mxu0 0
    %380 = vmatprep.subr.bf16.mxu0 0
    %381 = vmatpush2.bf16.msra.mxu0 0
    %382 = vmatprep.subr.bf16.mxu0 0
    %383 = vmatpush2.bf16.msra.mxu0 0
    %384 = vmatprep.subr.bf16.mxu0 0
    %385 = vmatpush2.bf16.msra.mxu0 0
    %386 = vmatprep.subr.bf16.mxu0 0
    %387 = vmatpush2.bf16.msra.mxu0 0
    %388 = vmatprep.mubr.bf16.mxu0 0
    %389 = vmatmul.mubr.bf16.gmra.mxu0 %v124
    %v390 = vpop.f32.mrf.mxu0
    %v391 = vadd.f32 %v171, %v390
    %v392 = vpop.f32.mrf.mxu0
    %v393 = vpop.f32.mrf.mxu0
    %v394 = vadd.f32 %v171, %v393
    %v395 = vpop.f32.mrf.mxu0
    %396 = vmatprep.mubr.bf16.mxu0 0
    %397 = vmatmul.mubr.bf16.gmra.mxu0 %v125
    %v398 = vpop.f32.mrf.mxu0
    %v399 = vadd.f32 %v171, %v398
    %v400 = vpop.f32.mrf.mxu0
    %v401 = vpop.f32.mrf.mxu0
    %v402 = vadd.f32 %v171, %v401
    %v403 = vpop.f32.mrf.mxu0
    %404 = vdwg.mxu0
    %v405 = vmul.f32 %v338, 0.17677669
    %v406 = vmul.f32 %v342, 0.17677669
    %v407 = vmul.f32 %v348, 0.17677669
    %v408 = vmul.f32 %v352, 0.17677669
    %v409 = vpack.c.bf16 %v406, %v405
    %v410 = vpack.c.bf16 %v408, %v407
    %v413 = vunpack.c.l.b16 %v409
    %v414 = vunpack.c.h.b16 %v409
    %v415 = vunpack.c.l.b16 %v410
    %v416 = vunpack.c.h.b16 %v410
    %v417 = vpack.c.b16 %v413, %v413
    %v418 = vpack.c.b16 %v414, %v414
    %v419 = vpack.c.b16 %v415, %v415
    %v420 = vpack.c.b16 %v416, %v416
    %425 = vst [vmem:[#allocation7] sm:$0xf] %v417
    %426 = vst [vmem:[#allocation7 + $0x4] sm:$0xf] %v418
    %427 = vst [vmem:[#allocation7 + $0x8] sm:$0xf] %v419
    %428 = vst [vmem:[#allocation7 + $0xc] sm:$0xf] %v420
    %v429 = vpack.c.bf16 %v344, %v340
    %v430 = vpack.c.bf16 %v394, %v391
    %v431 = vpack.c.bf16 %v354, %v350
    %v432 = vpack.c.bf16 %v402, %v399
    %v437 = vunpack.c.l.b16 %v429
    %v438 = vunpack.c.l.b16 %v430
    %v439 = vunpack.c.h.b16 %v429
    %v440 = vunpack.c.h.b16 %v430
    %v441 = vunpack.c.l.b16 %v431
    %v442 = vunpack.c.l.b16 %v432
    %v443 = vunpack.c.h.b16 %v431
    %v444 = vunpack.c.h.b16 %v432
    %v445 = vpack.c.b16 %v438, %v437
    %v446 = vpack.c.b16 %v440, %v439
    %v447 = vpack.c.b16 %v442, %v441
    %v448 = vpack.c.b16 %v444, %v443
    %453 = vst [vmem:[#allocation8] sm:$0xff] %v445
    %454 = vst [vmem:[#allocation8 + $0x8] sm:$0xff] %v446
    %455 = vst [vmem:[#allocation8 + $0x10] sm:$0xff] %v447
    %456 = vst [vmem:[#allocation8 + $0x18] sm:$0xff] %v448
    // Predicated region
    $region30: #{tpu_custom_call.1} parent=1 // pred_check
      _
    $region31: #{tpu_custom_call.1} parent=1 // pred_check_branch
      %458 = sbr.rel (0) target = $region33
    $region32: #{tpu_custom_call.1} parent=1 // pred_region
      %s460 = ssub.s32 256, 256
      %461 = vsyncadd [#allocation4], %s460
      %s462 = sshll.u32 [#allocation7], 4
      %s463 = int_to_ptr.vmem [resolvable:$true] %s462
      %468 = dma.vmem_to_hbm [thread:$0]  %s463, 256, %s5, [#allocation4], 64, 64, 4
    $region33: #{tpu_custom_call.1} parent=1 // pred_fallthru
      _
    // Predicated region
    $region34: #{tpu_custom_call.1} parent=1 // pred_check
      _
    $region35: #{tpu_custom_call.1} parent=1 // pred_check_branch
      %470 = sbr.rel (0) target = $region37
    $region36: #{tpu_custom_call.1} parent=1 // pred_region
      %s472 = ssub.s32 512, 512
      %473 = vsyncadd [#allocation9], %s472
      %s474 = sshll.u32 [#allocation8], 4
      %s475 = int_to_ptr.vmem [resolvable:$true] %s474
      %480 = dma.vmem_to_hbm [thread:$0]  %s475, 512, %s6, [#allocation9], 128, 128, 8
    $region37: #{tpu_custom_call.1} parent=1 // pred_fallthru
      _
    // Predicated region
    $region38: #{tpu_custom_call.1} parent=1 // pred_check
      _
    $region39: #{tpu_custom_call.1} parent=1 // pred_check_branch
      %482 = sbr.rel (0) target = $region41
    $region40: #{tpu_custom_call.1} parent=1 // pred_region
      %483 = dma.done [#allocation4], 256
    $region41: #{tpu_custom_call.1} parent=1 // pred_fallthru
      _
    // Predicated region
    $region42: #{tpu_custom_call.1} parent=1 // pred_check
      _
    $region43: #{tpu_custom_call.1} parent=1 // pred_check_branch
      %485 = sbr.rel (0) target = $region45
    $region44: #{tpu_custom_call.1} parent=1 // pred_region
      %486 = dma.done [#allocation9], 512
    $region45: #{tpu_custom_call.1} parent=1 // pred_fallthru
      _
    %487 = vsyncpa [#allocation3], 1
    %488 = vsyncpa [#allocation6], 1
    %489 = vsyncpa [#allocation4], 1
    %490 = vsyncpa [#allocation9], 1

</llo_original>
